<compile_context>
chip_gen: v6e
topology: v6e:2x2x1
jax: 0.10.0
libtpu: 0.0.40
codegen_flags: <defaults>
</compile_context>

<pallas_src>
import functools

import jax
import jax.numpy as jnp
from jax.experimental import pallas as pl
from jax.experimental.pallas import tpu as pltpu

INPUT_SIZE = 28
HIDDEN = 64
NUM_CLASSES = 10
OUT_PAD = 128   # lane-dense padded class dimension


def _lstm_kernel(x_ref, wcat_ref, b_ref, wout_ref, bout_ref, out_ref, *,
                 hidden, seq_len, batch):
    H = hidden
    # Weights / bias are tiny; load once, resident for the whole recurrence.
    w_cat = wcat_ref[...]            # (H + IN_PAD, 4H) fused [W_hh^T ; W_ih^T]
    b = b_ref[...]                   # (B, 4H) pre-broadcast bias

    h = jnp.zeros((batch, H), jnp.float32)
    c = jnp.zeros((batch, H), jnp.float32)

    # seq_len is a compile-time constant: fully unrolled straight-line loop so
    # the scheduler can interleave the next step's MXU push with this step's
    # EUP (sigmoid/tanh) and VPU work around the h/c dependency.
    for t in range(seq_len):
        x_t = x_ref[t]                               # (B, IN_PAD)
        hx = jnp.concatenate([h, x_t], axis=-1)      # (B, H + IN_PAD) = 1 vreg wide
        gates = jnp.dot(hx, w_cat,
                        preferred_element_type=jnp.float32) + b   # (B, 4H)
        # Gate layout is (i, f, o, g): one contiguous sigmoid, one tanh.
        sig = jax.nn.sigmoid(gates[:, :3 * H])
        i_g = sig[:, 0 * H:1 * H]
        f_g = sig[:, 1 * H:2 * H]
        o_g = sig[:, 2 * H:3 * H]
        g_g = jnp.tanh(gates[:, 3 * H:])
        c = f_g * c + i_g * g_g
        h = o_g * jnp.tanh(c)

    # Fused classifier head on the last hidden state (lane-dense padded out).
    out_ref[...] = (jnp.dot(h, wout_ref[...],
                            preferred_element_type=jnp.float32)
                    + bout_ref[...]).astype(out_ref.dtype)


@jax.jit
def rnn_forward(x, params):
    """x: (B, T, INPUT_SIZE) float32 -> (B, NUM_CLASSES) float32."""
    w_ih, w_hh, b_ih, b_hh, w_out, b_out = params
    B, T, IN = x.shape
    H = w_hh.shape[1]
    # Pad the input feature dim so (H + in_pad) is a multiple of 128 lanes
    # (28 -> 64 for H=64, making [h|x] exactly one vreg wide).
    in_pad = pl.cdiv(H + IN, 128) * 128 - H

    # Reorder gate blocks from PyTorch (i, f, g, o) to (i, f, o, g).
    idx = jnp.arange(H)
    perm = jnp.concatenate([idx, idx + H, idx + 3 * H, idx + 2 * H])
    w_ih_r = w_ih[perm]                     # (4H, IN)
    w_hh_r = w_hh[perm]                     # (4H, H)
    b_r = (b_ih + b_hh)[perm]               # (4H,)

    # Fused gate weight: rows [0:H] multiply h, rows [H:H+in_pad] multiply x.
    w_ih_p = jnp.pad(w_ih_r, ((0, 0), (0, in_pad - IN)))       # (4H, in_pad)
    w_cat = jnp.concatenate([w_hh_r.T, w_ih_p.T], axis=0)      # (H+in_pad, 4H)

    b_bcast = jnp.broadcast_to(b_r[None, :], (B, 4 * H))       # hoisted broadcast

    # Time-major, feature-padded input; whole sequence resident in VMEM.
    x_tm = jnp.transpose(x, (1, 0, 2))                         # (T, B, IN)
    x_tm = jnp.pad(x_tm, ((0, 0), (0, 0), (0, in_pad - IN)))   # (T, B, in_pad)

    # Lane-dense classifier weights (classes padded 10 -> OUT_PAD).
    w_out_p = jnp.zeros((H, OUT_PAD), jnp.float32).at[:, :NUM_CLASSES].set(w_out.T)
    b_out_p = jnp.zeros((OUT_PAD,), jnp.float32).at[:NUM_CLASSES].set(b_out)
    b_out_b = jnp.broadcast_to(b_out_p[None, :], (B, OUT_PAD))

    kernel = functools.partial(_lstm_kernel, hidden=H, seq_len=T, batch=B)
    vmem = pl.BlockSpec(memory_space=pltpu.MemorySpace.VMEM)

    out_padded = pl.pallas_call(
        kernel,
        out_shape=jax.ShapeDtypeStruct((B, OUT_PAD), jnp.float32),
        in_specs=[vmem, vmem, vmem, vmem, vmem],
        out_specs=vmem,
    )(x_tm, w_cat, b_bcast, w_out_p, b_out_b)

    return out_padded[:, :NUM_CLASSES]


def _reference(x, params):
    """Pure-JAX reference matching torch.nn.LSTM + Linear semantics."""
    w_ih, w_hh, b_ih, b_hh, w_out, b_out = params
    B, T, _ = x.shape
    H = w_hh.shape[1]

    def step(carry, x_t):
        h, c = carry
        gates = x_t @ w_ih.T + b_ih + h @ w_hh.T + b_hh
        i = jax.nn.sigmoid(gates[:, 0 * H:1 * H])
        f = jax.nn.sigmoid(gates[:, 1 * H:2 * H])
        g = jnp.tanh(gates[:, 2 * H:3 * H])
        o = jax.nn.sigmoid(gates[:, 3 * H:4 * H])
        c_new = f * c + i * g
        h_new = o * jnp.tanh(c_new)
        return (h_new, c_new), None

    init = (jnp.zeros((B, H), jnp.float32), jnp.zeros((B, H), jnp.float32))
    (h_T, _), _ = jax.lax.scan(step, init, jnp.transpose(x, (1, 0, 2)))
    return h_T @ w_out.T + b_out


def init_params(key, input_size=INPUT_SIZE, hidden=HIDDEN,
                num_classes=NUM_CLASSES):
    # Deterministic init mirroring PyTorch's uniform(-1/sqrt(H), 1/sqrt(H)).
    ks = jax.random.split(key, 6)
    stdv = 1.0 / jnp.sqrt(jnp.float32(hidden))
    u = lambda k, shape: jax.random.uniform(k, shape, jnp.float32, -stdv, stdv)
    w_ih = u(ks[0], (4 * hidden, input_size))
    w_hh = u(ks[1], (4 * hidden, hidden))
    b_ih = u(ks[2], (4 * hidden,))
    b_hh = u(ks[3], (4 * hidden,))
    w_out = u(ks[4], (num_classes, hidden))
    b_out = u(ks[5], (num_classes,))
    return (w_ih, w_hh, b_ih, b_hh, w_out, b_out)


if __name__ == "__main__":
    key = jax.random.PRNGKey(0)
    k_x, k_p = jax.random.split(key)

    B, T = 2, 8  # small shapes; MNIST row-wise would be T=28
    x = jax.random.normal(k_x, (B, T, INPUT_SIZE), jnp.float32)
    params = init_params(k_p)

    out = jax.block_until_ready(rnn_forward(x, params))

    ref = _reference(x, params)
    assert out.shape == (B, NUM_CLASSES)
    assert jnp.allclose(out, ref, atol=1e-4, rtol=1e-4), (
        "Pallas LSTM output mismatch vs reference")

    print("KERNEL_OK")
</pallas_src>

<mosaic_0001>
module attributes {stable_mosaic.version = 11 : i64} {
  func.func @_lstm_kernel(%arg0: memref<8x2x64xf32, #tpu.memory_space<vmem>>, %arg1: memref<128x256xf32, #tpu.memory_space<vmem>>, %arg2: memref<2x256xf32, #tpu.memory_space<vmem>>, %arg3: memref<64x128xf32, #tpu.memory_space<vmem>>, %arg4: memref<2x128xf32, #tpu.memory_space<vmem>>, %arg5: memref<2x128xf32, #tpu.memory_space<vmem>>) attributes {dimension_semantics = [], scalar_prefetch = 0 : i64, scratch_operands = 0 : i64, tpu.core_type = #tpu.core_type<tc>} {
    %c0 = arith.constant 0 : index
    %c0_0 = arith.constant 0 : index
    %0 = vector.load %arg1[%c0, %c0_0] : memref<128x256xf32, #tpu.memory_space<vmem>>, vector<128x256xf32>
    %c0_1 = arith.constant 0 : index
    %c0_2 = arith.constant 0 : index
    %1 = vector.load %arg2[%c0_1, %c0_2] : memref<2x256xf32, #tpu.memory_space<vmem>>, vector<2x256xf32>
    %cst = arith.constant 0.000000e+00 : f32
    %2 = vector.broadcast %cst : f32 to vector<2x64xf32>
    %cst_3 = arith.constant 0.000000e+00 : f32
    %3 = vector.broadcast %cst_3 : f32 to vector<2x64xf32>
    %c0_4 = arith.constant 0 : index
    %c0_5 = arith.constant 0 : index
    %c0_6 = arith.constant 0 : index
    %4 = vector.load %arg0[%c0_4, %c0_5, %c0_6] : memref<8x2x64xf32, #tpu.memory_space<vmem>>, vector<1x2x64xf32>
    %5 = vector.shape_cast %4 : vector<1x2x64xf32> to vector<2x64xf32>
    %6 = tpu.concatenate %2, %5 in 1 : vector<2x64xf32>, vector<2x64xf32> -> vector<2x128xf32>
    %cst_7 = arith.constant dense<0.000000e+00> : vector<2x256xf32>
    %7 = tpu.matmul %6, %0, %cst_7 {dimension_numbers = #tpu.dot_dimension_numbers<[1], [0], [0], [1], [0, 0, 1, 1], [], []>} : vector<2x128xf32>, vector<128x256xf32>, vector<2x256xf32> -> vector<2x256xf32>
    %8 = arith.addf %7, %1 : vector<2x256xf32>
    %9 = vector.extract_strided_slice %8 {offsets = [0, 0], sizes = [2, 192], strides = [1, 1]} : vector<2x256xf32> to vector<2x192xf32>
    %10 = arith.negf %9 : vector<2x192xf32>
    %11 = math.exp %10 : vector<2x192xf32>
    %cst_8 = arith.constant 1.000000e+00 : f32
    %12 = vector.broadcast %cst_8 : f32 to vector<2x192xf32>
    %13 = arith.addf %12, %11 : vector<2x192xf32>
    %14 = arith.divf %12, %13 : vector<2x192xf32>
    %15 = vector.extract_strided_slice %14 {offsets = [0, 0], sizes = [2, 64], strides = [1, 1]} : vector<2x192xf32> to vector<2x64xf32>
    %16 = vector.extract_strided_slice %14 {offsets = [0, 64], sizes = [2, 64], strides = [1, 1]} : vector<2x192xf32> to vector<2x64xf32>
    %17 = vector.extract_strided_slice %14 {offsets = [0, 128], sizes = [2, 64], strides = [1, 1]} : vector<2x192xf32> to vector<2x64xf32>
    %18 = vector.extract_strided_slice %8 {offsets = [0, 192], sizes = [2, 64], strides = [1, 1]} : vector<2x256xf32> to vector<2x64xf32>
    %19 = math.tanh %18 : vector<2x64xf32>
    %20 = arith.mulf %16, %3 : vector<2x64xf32>
    %21 = arith.mulf %15, %19 : vector<2x64xf32>
    %22 = arith.addf %20, %21 : vector<2x64xf32>
    %23 = math.tanh %22 : vector<2x64xf32>
    %24 = arith.mulf %17, %23 : vector<2x64xf32>
    %c1 = arith.constant 1 : index
    %c0_9 = arith.constant 0 : index
    %c0_10 = arith.constant 0 : index
    %25 = vector.load %arg0[%c1, %c0_9, %c0_10] : memref<8x2x64xf32, #tpu.memory_space<vmem>>, vector<1x2x64xf32>
    %26 = vector.shape_cast %25 : vector<1x2x64xf32> to vector<2x64xf32>
    %27 = tpu.concatenate %24, %26 in 1 : vector<2x64xf32>, vector<2x64xf32> -> vector<2x128xf32>
    %cst_11 = arith.constant dense<0.000000e+00> : vector<2x256xf32>
    %28 = tpu.matmul %27, %0, %cst_11 {dimension_numbers = #tpu.dot_dimension_numbers<[1], [0], [0], [1], [0, 0, 1, 1], [], []>} : vector<2x128xf32>, vector<128x256xf32>, vector<2x256xf32> -> vector<2x256xf32>
    %29 = arith.addf %28, %1 : vector<2x256xf32>
    %30 = vector.extract_strided_slice %29 {offsets = [0, 0], sizes = [2, 192], strides = [1, 1]} : vector<2x256xf32> to vector<2x192xf32>
    %31 = arith.negf %30 : vector<2x192xf32>
    %32 = math.exp %31 : vector<2x192xf32>
    %cst_12 = arith.constant 1.000000e+00 : f32
    %33 = vector.broadcast %cst_12 : f32 to vector<2x192xf32>
    %34 = arith.addf %33, %32 : vector<2x192xf32>
    %35 = arith.divf %33, %34 : vector<2x192xf32>
    %36 = vector.extract_strided_slice %35 {offsets = [0, 0], sizes = [2, 64], strides = [1, 1]} : vector<2x192xf32> to vector<2x64xf32>
    %37 = vector.extract_strided_slice %35 {offsets = [0, 64], sizes = [2, 64], strides = [1, 1]} : vector<2x192xf32> to vector<2x64xf32>
    %38 = vector.extract_strided_slice %35 {offsets = [0, 128], sizes = [2, 64], strides = [1, 1]} : vector<2x192xf32> to vector<2x64xf32>
    %39 = vector.extract_strided_slice %29 {offsets = [0, 192], sizes = [2, 64], strides = [1, 1]} : vector<2x256xf32> to vector<2x64xf32>
    %40 = math.tanh %39 : vector<2x64xf32>
    %41 = arith.mulf %37, %22 : vector<2x64xf32>
    %42 = arith.mulf %36, %40 : vector<2x64xf32>
    %43 = arith.addf %41, %42 : vector<2x64xf32>
    %44 = math.tanh %43 : vector<2x64xf32>
    %45 = arith.mulf %38, %44 : vector<2x64xf32>
    %c2 = arith.constant 2 : index
    %c0_13 = arith.constant 0 : index
    %c0_14 = arith.constant 0 : index
    %46 = vector.load %arg0[%c2, %c0_13, %c0_14] : memref<8x2x64xf32, #tpu.memory_space<vmem>>, vector<1x2x64xf32>
    %47 = vector.shape_cast %46 : vector<1x2x64xf32> to vector<2x64xf32>
    %48 = tpu.concatenate %45, %47 in 1 : vector<2x64xf32>, vector<2x64xf32> -> vector<2x128xf32>
    %cst_15 = arith.constant dense<0.000000e+00> : vector<2x256xf32>
    %49 = tpu.matmul %48, %0, %cst_15 {dimension_numbers = #tpu.dot_dimension_numbers<[1], [0], [0], [1], [0, 0, 1, 1], [], []>} : vector<2x128xf32>, vector<128x256xf32>, vector<2x256xf32> -> vector<2x256xf32>
    %50 = arith.addf %49, %1 : vector<2x256xf32>
    %51 = vector.extract_strided_slice %50 {offsets = [0, 0], sizes = [2, 192], strides = [1, 1]} : vector<2x256xf32> to vector<2x192xf32>
    %52 = arith.negf %51 : vector<2x192xf32>
    %53 = math.exp %52 : vector<2x192xf32>
    %cst_16 = arith.constant 1.000000e+00 : f32
    %54 = vector.broadcast %cst_16 : f32 to vector<2x192xf32>
    %55 = arith.addf %54, %53 : vector<2x192xf32>
    %56 = arith.divf %54, %55 : vector<2x192xf32>
    %57 = vector.extract_strided_slice %56 {offsets = [0, 0], sizes = [2, 64], strides = [1, 1]} : vector<2x192xf32> to vector<2x64xf32>
    %58 = vector.extract_strided_slice %56 {offsets = [0, 64], sizes = [2, 64], strides = [1, 1]} : vector<2x192xf32> to vector<2x64xf32>
    %59 = vector.extract_strided_slice %56 {offsets = [0, 128], sizes = [2, 64], strides = [1, 1]} : vector<2x192xf32> to vector<2x64xf32>
    %60 = vector.extract_strided_slice %50 {offsets = [0, 192], sizes = [2, 64], strides = [1, 1]} : vector<2x256xf32> to vector<2x64xf32>
    %61 = math.tanh %60 : vector<2x64xf32>
    %62 = arith.mulf %58, %43 : vector<2x64xf32>
    %63 = arith.mulf %57, %61 : vector<2x64xf32>
    %64 = arith.addf %62, %63 : vector<2x64xf32>
    %65 = math.tanh %64 : vector<2x64xf32>
    %66 = arith.mulf %59, %65 : vector<2x64xf32>
    %c3 = arith.constant 3 : index
    %c0_17 = arith.constant 0 : index
    %c0_18 = arith.constant 0 : index
    %67 = vector.load %arg0[%c3, %c0_17, %c0_18] : memref<8x2x64xf32, #tpu.memory_space<vmem>>, vector<1x2x64xf32>
    %68 = vector.shape_cast %67 : vector<1x2x64xf32> to vector<2x64xf32>
    %69 = tpu.concatenate %66, %68 in 1 : vector<2x64xf32>, vector<2x64xf32> -> vector<2x128xf32>
    %cst_19 = arith.constant dense<0.000000e+00> : vector<2x256xf32>
    %70 = tpu.matmul %69, %0, %cst_19 {dimension_numbers = #tpu.dot_dimension_numbers<[1], [0], [0], [1], [0, 0, 1, 1], [], []>} : vector<2x128xf32>, vector<128x256xf32>, vector<2x256xf32> -> vector<2x256xf32>
    %71 = arith.addf %70, %1 : vector<2x256xf32>
    %72 = vector.extract_strided_slice %71 {offsets = [0, 0], sizes = [2, 192], strides = [1, 1]} : vector<2x256xf32> to vector<2x192xf32>
    %73 = arith.negf %72 : vector<2x192xf32>
    %74 = math.exp %73 : vector<2x192xf32>
    %cst_20 = arith.constant 1.000000e+00 : f32
    %75 = vector.broadcast %cst_20 : f32 to vector<2x192xf32>
    %76 = arith.addf %75, %74 : vector<2x192xf32>
    %77 = arith.divf %75, %76 : vector<2x192xf32>
    %78 = vector.extract_strided_slice %77 {offsets = [0, 0], sizes = [2, 64], strides = [1, 1]} : vector<2x192xf32> to vector<2x64xf32>
    %79 = vector.extract_strided_slice %77 {offsets = [0, 64], sizes = [2, 64], strides = [1, 1]} : vector<2x192xf32> to vector<2x64xf32>
    %80 = vector.extract_strided_slice %77 {offsets = [0, 128], sizes = [2, 64], strides = [1, 1]} : vector<2x192xf32> to vector<2x64xf32>
    %81 = vector.extract_strided_slice %71 {offsets = [0, 192], sizes = [2, 64], strides = [1, 1]} : vector<2x256xf32> to vector<2x64xf32>
    %82 = math.tanh %81 : vector<2x64xf32>
    %83 = arith.mulf %79, %64 : vector<2x64xf32>
    %84 = arith.mulf %78, %82 : vector<2x64xf32>
    %85 = arith.addf %83, %84 : vector<2x64xf32>
    %86 = math.tanh %85 : vector<2x64xf32>
    %87 = arith.mulf %80, %86 : vector<2x64xf32>
    %c4 = arith.constant 4 : index
    %c0_21 = arith.constant 0 : index
    %c0_22 = arith.constant 0 : index
    %88 = vector.load %arg0[%c4, %c0_21, %c0_22] : memref<8x2x64xf32, #tpu.memory_space<vmem>>, vector<1x2x64xf32>
    %89 = vector.shape_cast %88 : vector<1x2x64xf32> to vector<2x64xf32>
    %90 = tpu.concatenate %87, %89 in 1 : vector<2x64xf32>, vector<2x64xf32> -> vector<2x128xf32>
    %cst_23 = arith.constant dense<0.000000e+00> : vector<2x256xf32>
    %91 = tpu.matmul %90, %0, %cst_23 {dimension_numbers = #tpu.dot_dimension_numbers<[1], [0], [0], [1], [0, 0, 1, 1], [], []>} : vector<2x128xf32>, vector<128x256xf32>, vector<2x256xf32> -> vector<2x256xf32>
    %92 = arith.addf %91, %1 : vector<2x256xf32>
    %93 = vector.extract_strided_slice %92 {offsets = [0, 0], sizes = [2, 192], strides = [1, 1]} : vector<2x256xf32> to vector<2x192xf32>
    %94 = arith.negf %93 : vector<2x192xf32>
    %95 = math.exp %94 : vector<2x192xf32>
    %cst_24 = arith.constant 1.000000e+00 : f32
    %96 = vector.broadcast %cst_24 : f32 to vector<2x192xf32>
    %97 = arith.addf %96, %95 : vector<2x192xf32>
    %98 = arith.divf %96, %97 : vector<2x192xf32>
    %99 = vector.extract_strided_slice %98 {offsets = [0, 0], sizes = [2, 64], strides = [1, 1]} : vector<2x192xf32> to vector<2x64xf32>
    %100 = vector.extract_strided_slice %98 {offsets = [0, 64], sizes = [2, 64], strides = [1, 1]} : vector<2x192xf32> to vector<2x64xf32>
    %101 = vector.extract_strided_slice %98 {offsets = [0, 128], sizes = [2, 64], strides = [1, 1]} : vector<2x192xf32> to vector<2x64xf32>
    %102 = vector.extract_strided_slice %92 {offsets = [0, 192], sizes = [2, 64], strides = [1, 1]} : vector<2x256xf32> to vector<2x64xf32>
    %103 = math.tanh %102 : vector<2x64xf32>
    %104 = arith.mulf %100, %85 : vector<2x64xf32>
    %105 = arith.mulf %99, %103 : vector<2x64xf32>
    %106 = arith.addf %104, %105 : vector<2x64xf32>
    %107 = math.tanh %106 : vector<2x64xf32>
    %108 = arith.mulf %101, %107 : vector<2x64xf32>
    %c5 = arith.constant 5 : index
    %c0_25 = arith.constant 0 : index
    %c0_26 = arith.constant 0 : index
    %109 = vector.load %arg0[%c5, %c0_25, %c0_26] : memref<8x2x64xf32, #tpu.memory_space<vmem>>, vector<1x2x64xf32>
    %110 = vector.shape_cast %109 : vector<1x2x64xf32> to vector<2x64xf32>
    %111 = tpu.concatenate %108, %110 in 1 : vector<2x64xf32>, vector<2x64xf32> -> vector<2x128xf32>
    %cst_27 = arith.constant dense<0.000000e+00> : vector<2x256xf32>
    %112 = tpu.matmul %111, %0, %cst_27 {dimension_numbers = #tpu.dot_dimension_numbers<[1], [0], [0], [1], [0, 0, 1, 1], [], []>} : vector<2x128xf32>, vector<128x256xf32>, vector<2x256xf32> -> vector<2x256xf32>
    %113 = arith.addf %112, %1 : vector<2x256xf32>
    %114 = vector.extract_strided_slice %113 {offsets = [0, 0], sizes = [2, 192], strides = [1, 1]} : vector<2x256xf32> to vector<2x192xf32>
    %115 = arith.negf %114 : vector<2x192xf32>
    %116 = math.exp %115 : vector<2x192xf32>
    %cst_28 = arith.constant 1.000000e+00 : f32
    %117 = vector.broadcast %cst_28 : f32 to vector<2x192xf32>
    %118 = arith.addf %117, %116 : vector<2x192xf32>
    %119 = arith.divf %117, %118 : vector<2x192xf32>
    %120 = vector.extract_strided_slice %119 {offsets = [0, 0], sizes = [2, 64], strides = [1, 1]} : vector<2x192xf32> to vector<2x64xf32>
    %121 = vector.extract_strided_slice %119 {offsets = [0, 64], sizes = [2, 64], strides = [1, 1]} : vector<2x192xf32> to vector<2x64xf32>
    %122 = vector.extract_strided_slice %119 {offsets = [0, 128], sizes = [2, 64], strides = [1, 1]} : vector<2x192xf32> to vector<2x64xf32>
    %123 = vector.extract_strided_slice %113 {offsets = [0, 192], sizes = [2, 64], strides = [1, 1]} : vector<2x256xf32> to vector<2x64xf32>
    %124 = math.tanh %123 : vector<2x64xf32>
    %125 = arith.mulf %121, %106 : vector<2x64xf32>
    %126 = arith.mulf %120, %124 : vector<2x64xf32>
    %127 = arith.addf %125, %126 : vector<2x64xf32>
    %128 = math.tanh %127 : vector<2x64xf32>
    %129 = arith.mulf %122, %128 : vector<2x64xf32>
    %c6 = arith.constant 6 : index
    %c0_29 = arith.constant 0 : index
    %c0_30 = arith.constant 0 : index
    %130 = vector.load %arg0[%c6, %c0_29, %c0_30] : memref<8x2x64xf32, #tpu.memory_space<vmem>>, vector<1x2x64xf32>
    %131 = vector.shape_cast %130 : vector<1x2x64xf32> to vector<2x64xf32>
    %132 = tpu.concatenate %129, %131 in 1 : vector<2x64xf32>, vector<2x64xf32> -> vector<2x128xf32>
    %cst_31 = arith.constant dense<0.000000e+00> : vector<2x256xf32>
    %133 = tpu.matmul %132, %0, %cst_31 {dimension_numbers = #tpu.dot_dimension_numbers<[1], [0], [0], [1], [0, 0, 1, 1], [], []>} : vector<2x128xf32>, vector<128x256xf32>, vector<2x256xf32> -> vector<2x256xf32>
    %134 = arith.addf %133, %1 : vector<2x256xf32>
    %135 = vector.extract_strided_slice %134 {offsets = [0, 0], sizes = [2, 192], strides = [1, 1]} : vector<2x256xf32> to vector<2x192xf32>
    %136 = arith.negf %135 : vector<2x192xf32>
    %137 = math.exp %136 : vector<2x192xf32>
    %cst_32 = arith.constant 1.000000e+00 : f32
    %138 = vector.broadcast %cst_32 : f32 to vector<2x192xf32>
    %139 = arith.addf %138, %137 : vector<2x192xf32>
    %140 = arith.divf %138, %139 : vector<2x192xf32>
    %141 = vector.extract_strided_slice %140 {offsets = [0, 0], sizes = [2, 64], strides = [1, 1]} : vector<2x192xf32> to vector<2x64xf32>
    %142 = vector.extract_strided_slice %140 {offsets = [0, 64], sizes = [2, 64], strides = [1, 1]} : vector<2x192xf32> to vector<2x64xf32>
    %143 = vector.extract_strided_slice %140 {offsets = [0, 128], sizes = [2, 64], strides = [1, 1]} : vector<2x192xf32> to vector<2x64xf32>
    %144 = vector.extract_strided_slice %134 {offsets = [0, 192], sizes = [2, 64], strides = [1, 1]} : vector<2x256xf32> to vector<2x64xf32>
    %145 = math.tanh %144 : vector<2x64xf32>
    %146 = arith.mulf %142, %127 : vector<2x64xf32>
    %147 = arith.mulf %141, %145 : vector<2x64xf32>
    %148 = arith.addf %146, %147 : vector<2x64xf32>
    %149 = math.tanh %148 : vector<2x64xf32>
    %150 = arith.mulf %143, %149 : vector<2x64xf32>
    %c7 = arith.constant 7 : index
    %c0_33 = arith.constant 0 : index
    %c0_34 = arith.constant 0 : index
    %151 = vector.load %arg0[%c7, %c0_33, %c0_34] : memref<8x2x64xf32, #tpu.memory_space<vmem>>, vector<1x2x64xf32>
    %152 = vector.shape_cast %151 : vector<1x2x64xf32> to vector<2x64xf32>
    %153 = tpu.concatenate %150, %152 in 1 : vector<2x64xf32>, vector<2x64xf32> -> vector<2x128xf32>
    %cst_35 = arith.constant dense<0.000000e+00> : vector<2x256xf32>
    %154 = tpu.matmul %153, %0, %cst_35 {dimension_numbers = #tpu.dot_dimension_numbers<[1], [0], [0], [1], [0, 0, 1, 1], [], []>} : vector<2x128xf32>, vector<128x256xf32>, vector<2x256xf32> -> vector<2x256xf32>
    %155 = arith.addf %154, %1 : vector<2x256xf32>
    %156 = vector.extract_strided_slice %155 {offsets = [0, 0], sizes = [2, 192], strides = [1, 1]} : vector<2x256xf32> to vector<2x192xf32>
    %157 = arith.negf %156 : vector<2x192xf32>
    %158 = math.exp %157 : vector<2x192xf32>
    %cst_36 = arith.constant 1.000000e+00 : f32
    %159 = vector.broadcast %cst_36 : f32 to vector<2x192xf32>
    %160 = arith.addf %159, %158 : vector<2x192xf32>
    %161 = arith.divf %159, %160 : vector<2x192xf32>
    %162 = vector.extract_strided_slice %161 {offsets = [0, 0], sizes = [2, 64], strides = [1, 1]} : vector<2x192xf32> to vector<2x64xf32>
    %163 = vector.extract_strided_slice %161 {offsets = [0, 64], sizes = [2, 64], strides = [1, 1]} : vector<2x192xf32> to vector<2x64xf32>
    %164 = vector.extract_strided_slice %161 {offsets = [0, 128], sizes = [2, 64], strides = [1, 1]} : vector<2x192xf32> to vector<2x64xf32>
    %165 = vector.extract_strided_slice %155 {offsets = [0, 192], sizes = [2, 64], strides = [1, 1]} : vector<2x256xf32> to vector<2x64xf32>
    %166 = math.tanh %165 : vector<2x64xf32>
    %167 = arith.mulf %163, %148 : vector<2x64xf32>
    %168 = arith.mulf %162, %166 : vector<2x64xf32>
    %169 = arith.addf %167, %168 : vector<2x64xf32>
    %170 = math.tanh %169 : vector<2x64xf32>
    %171 = arith.mulf %164, %170 : vector<2x64xf32>
    %c0_37 = arith.constant 0 : index
    %c0_38 = arith.constant 0 : index
    %172 = vector.load %arg3[%c0_37, %c0_38] : memref<64x128xf32, #tpu.memory_space<vmem>>, vector<64x128xf32>
    %cst_39 = arith.constant dense<0.000000e+00> : vector<2x128xf32>
    %173 = tpu.matmul %171, %172, %cst_39 {dimension_numbers = #tpu.dot_dimension_numbers<[1], [0], [0], [1], [0, 0, 1, 1], [], []>} : vector<2x64xf32>, vector<64x128xf32>, vector<2x128xf32> -> vector<2x128xf32>
    %c0_40 = arith.constant 0 : index
    %c0_41 = arith.constant 0 : index
    %174 = vector.load %arg4[%c0_40, %c0_41] : memref<2x128xf32, #tpu.memory_space<vmem>>, vector<2x128xf32>
    %175 = arith.addf %173, %174 : vector<2x128xf32>
    %c0_42 = arith.constant 0 : index
    %c0_43 = arith.constant 0 : index
    %176 = vector.load %arg5[%c0_42, %c0_43] : memref<2x128xf32, #tpu.memory_space<vmem>>, vector<2x128xf32>
    tpu.vector_store %arg5[%c0_42, %c0_43], %175 {strides = array<i32>} : memref<2x128xf32, #tpu.memory_space<vmem>>, vector<2x128xf32>,
    return
  }
}

</mosaic_0001>

<llo_original>
// kernel: rnn_forward.1
$region0: #{rnn_forward.1}
  #allocation0 [shape = 'u32[]', space=smem, size = 0x4, offset = 0x4, fixed_abs, tag = 'smem constant byte address 0x4 - core index']
  #allocation1 [shape = 'u32[144,128]{1,0:T(1,128)}', space=vmem, size = 0x12000, scoped, tag = 'internal scratch']
  %s0 = inlined_call_operand.vmem [shape: f32[8,2,64], index: 0, kind: input, shape index: {}]
  %s1 = inlined_call_operand.vmem [shape: f32[128,256], index: 1, kind: input, shape index: {}]
  %s2 = inlined_call_operand.vmem [shape: f32[2,256], index: 2, kind: input, shape index: {}]
  %s3 = inlined_call_operand.vmem [shape: f32[64,128], index: 3, kind: input, shape index: {}]
  %s4 = inlined_call_operand.vmem [shape: f32[2,128], index: 4, kind: input, shape index: {}]
  %s5 = inlined_call_operand.hbm [shape: f32[2,128], index: 5, kind: output, shape index: {}]
  %s6 = sld [smem:[#allocation0]]
  $region30: #{rnn_forward.1} parent=0
    _
  %s8 = ssub.s32 1, %s6
  %s9 = scalar_select 0, %s8, %s6
  $region1: #{rnn_forward.1} parent=0
    #allocation2 [shape = 'u8[1024]{0}', space=vmem, size = 0x400, scoped, tag = 'output window, operand 0, single buffered']
    #allocation3 [shape = 's32[1]{0}', space=sflag, size = 0x4, scoped, tag = 'scoped memory for rnn_forward.1']
    %10 = vsyncpa [#allocation3], 0
    // Predicated region
    $region2: #{rnn_forward.1} parent=1 // pred_check
      _
    $region3: #{rnn_forward.1} parent=1 // pred_check_branch
      %12 = sbr.rel (0) target = $region5
    $region4: #{rnn_forward.1} parent=1 // pred_region
      _
    $region5: #{rnn_forward.1} parent=1 // pred_fallthru
      _
    // Predicated region
    $region6: #{rnn_forward.1} parent=1 // pred_check
      _
    $region7: #{rnn_forward.1} parent=1 // pred_check_branch
      %14 = sbr.rel (0) target = $region9
    $region8: #{rnn_forward.1} parent=1 // pred_region
      _
    $region9: #{rnn_forward.1} parent=1 // pred_fallthru
      _
    // Predicated region
    $region10: #{rnn_forward.1} parent=1 // pred_check
      _
    $region11: #{rnn_forward.1} parent=1 // pred_check_branch
      %16 = sbr.rel (0) target = $region13
    $region12: #{rnn_forward.1} parent=1 // pred_region
      _
    $region13: #{rnn_forward.1} parent=1 // pred_fallthru
      _
    // Predicated region
    $region14: #{rnn_forward.1} parent=1 // pred_check
      _
    $region15: #{rnn_forward.1} parent=1 // pred_check_branch
      %18 = sbr.rel (0) target = $region17
    $region16: #{rnn_forward.1} parent=1 // pred_region
      _
    $region17: #{rnn_forward.1} parent=1 // pred_fallthru
      _
    // Predicated region
    $region18: #{rnn_forward.1} parent=1 // pred_check
      _
    $region19: #{rnn_forward.1} parent=1 // pred_check_branch
      %20 = sbr.rel (0) target = $region21
    $region20: #{rnn_forward.1} parent=1 // pred_region
      _
    $region21: #{rnn_forward.1} parent=1 // pred_fallthru
      _
    %v21 = vld [vmem:[%s1] sm:$0xff]
    %v22 = vld [vmem:[%s1 + $0x8] sm:$0xff]
    %v23 = vld [vmem:[%s1 + $0x10] sm:$0xff]
    %v24 = vld [vmem:[%s1 + $0x18] sm:$0xff]
    %v25 = vld [vmem:[%s1 + $0x20] sm:$0xff]
    %v26 = vld [vmem:[%s1 + $0x28] sm:$0xff]
    %v27 = vld [vmem:[%s1 + $0x30] sm:$0xff]
    %v28 = vld [vmem:[%s1 + $0x38] sm:$0xff]
    %v29 = vld [vmem:[%s1 + $0x40] sm:$0xff]
    %v30 = vld [vmem:[%s1 + $0x48] sm:$0xff]
    %v31 = vld [vmem:[%s1 + $0x50] sm:$0xff]
    %v32 = vld [vmem:[%s1 + $0x58] sm:$0xff]
    %v33 = vld [vmem:[%s1 + $0x60] sm:$0xff]
    %v34 = vld [vmem:[%s1 + $0x68] sm:$0xff]
    %v35 = vld [vmem:[%s1 + $0x70] sm:$0xff]
    %v36 = vld [vmem:[%s1 + $0x78] sm:$0xff]
    %v37 = vld [vmem:[%s1 + $0x80] sm:$0xff]
    %v38 = vld [vmem:[%s1 + $0x88] sm:$0xff]
    %v39 = vld [vmem:[%s1 + $0x90] sm:$0xff]
    %v40 = vld [vmem:[%s1 + $0x98] sm:$0xff]
    %v41 = vld [vmem:[%s1 + $0xa0] sm:$0xff]
    %v42 = vld [vmem:[%s1 + $0xa8] sm:$0xff]
    %v43 = vld [vmem:[%s1 + $0xb0] sm:$0xff]
    %v44 = vld [vmem:[%s1 + $0xb8] sm:$0xff]
    %v45 = vld [vmem:[%s1 + $0xc0] sm:$0xff]
    %v46 = vld [vmem:[%s1 + $0xc8] sm:$0xff]
    %v47 = vld [vmem:[%s1 + $0xd0] sm:$0xff]
    %v48 = vld [vmem:[%s1 + $0xd8] sm:$0xff]
    %v49 = vld [vmem:[%s1 + $0xe0] sm:$0xff]
    %v50 = vld [vmem:[%s1 + $0xe8] sm:$0xff]
    %v51 = vld [vmem:[%s1 + $0xf0] sm:$0xff]
    %v52 = vld [vmem:[%s1 + $0xf8] sm:$0xff]
    %v53 = vld [vmem:[%s2] sm:$0xf]
    %v54 = vld [vmem:[%s0] sm:$0x3]
    %56 = vrot.lane.b32.xlu0 %v54, 64
    %v57 = vpop.permute.xlu0 %56
    %vm59 = vcmask 523264
    %v60 = vsel %vm59, 0.0, %v57
    %v63 = vunpack.c.l.s4 1983009808
    %v64 = vunpack.c.0.s8 %v63
    %v65 = vlaneseq
    %v66 = vshrl.u32 %v65, 7
    %v67 = vsub.s32 %v64, %v66
    %v68 = vrot.slane %v53, %v67
    %v69 = vcombine.high %v68, %v68
    %72 = vmatprep.subr.mxu0 %v52
    %73 = vmatpush1.msra.mxu0 %v51
    %74 = vmatprep.subr.mxu0 %v50
    %75 = vmatpush1.msra.mxu0 %v49
    %76 = vmatprep.subr.mxu0 %v48
    %77 = vmatpush1.msra.mxu0 %v47
    %78 = vmatprep.subr.mxu0 %v46
    %79 = vmatpush1.msra.mxu0 %v45
    %80 = vmatprep.subr.mxu0 %v44
    %81 = vmatpush1.msra.mxu0 %v43
    %82 = vmatprep.subr.mxu0 %v42
    %83 = vmatpush1.msra.mxu0 %v41
    %84 = vmatprep.subr.mxu0 %v40
    %85 = vmatpush1.msra.mxu0 %v39
    %86 = vmatprep.subr.mxu0 %v38
    %87 = vmatpush1.msra.mxu0 %v37
    %88 = vmatprep.subr.mxu0 %v36
    %89 = vmatpush1.msra.mxu0 %v35
    %90 = vmatprep.subr.mxu0 %v34
    %91 = vmatpush1.msra.mxu0 %v33
    %92 = vmatprep.subr.mxu0 %v32
    %93 = vmatpush1.msra.mxu0 %v31
    %94 = vmatprep.subr.mxu0 %v30
    %95 = vmatpush1.msra.mxu0 %v29
    %96 = vmatprep.subr.mxu0 %v28
    %97 = vmatpush1.msra.mxu0 %v27
    %98 = vmatprep.subr.mxu0 %v26
    %99 = vmatpush1.msra.mxu0 %v25
    %100 = vmatprep.subr.mxu0 %v24
    %101 = vmatpush1.msra.mxu0 %v23
    %102 = vmatprep.subr.mxu0 %v22
    %103 = vmatpush1.msra.mxu0 %v21
    %104 = vmatprep.subr.mxu0 0.0
    %105 = vmatpush2.msra.mxu0 0.0
    %106 = vmatprep.subr.mxu0 0.0
    %107 = vmatpush2.msra.mxu0 0.0
    %108 = vmatprep.subr.mxu0 0.0
    %109 = vmatpush2.msra.mxu0 0.0
    %110 = vmatprep.subr.mxu0 0.0
    %111 = vmatpush2.msra.mxu0 0.0
    %112 = vmatprep.subr.mxu0 0.0
    %113 = vmatpush2.msra.mxu0 0.0
    %114 = vmatprep.subr.mxu0 0.0
    %115 = vmatpush2.msra.mxu0 0.0
    %116 = vmatprep.subr.mxu0 0.0
    %117 = vmatpush2.msra.mxu0 0.0
    %118 = vmatprep.subr.mxu0 0.0
    %119 = vmatpush2.msra.mxu0 0.0
    %120 = vmatprep.subr.mxu0 0.0
    %121 = vmatpush2.msra.mxu0 0.0
    %122 = vmatprep.subr.mxu0 0.0
    %123 = vmatpush2.msra.mxu0 0.0
    %124 = vmatprep.subr.mxu0 0.0
    %125 = vmatpush2.msra.mxu0 0.0
    %126 = vmatprep.subr.mxu0 0.0
    %127 = vmatpush2.msra.mxu0 0.0
    %128 = vmatprep.subr.mxu0 0.0
    %129 = vmatpush2.msra.mxu0 0.0
    %130 = vmatprep.subr.mxu0 0.0
    %131 = vmatpush2.msra.mxu0 0.0
    %132 = vmatprep.subr.mxu0 0.0
    %133 = vmatpush2.msra.mxu0 0.0
    %134 = vmatprep.subr.mxu0 0.0
    %135 = vmatpush2.msra.mxu0 0.0
    %136 = vmatprep.mubr.f32.mxu0 0.0
    %137 = vmatmul.mubr.f32.gmra.mxu0 %v60
    %v138 = vpop.f32.mrf.mxu0
    %v139 = vadd.f32 %v68, %v138
    %v140 = vpop.f32.mrf.mxu0
    %v141 = vadd.f32 %v69, %v140
    %142 = vdwg.mxu0
    %v143 = vxor.u32 %v139, 2147483648
    %v144 = vxor.u32 %v141, 2147483648
    %v145 = vmul.f32 %v143, 1.442695
    %v146 = vpow.pop %v145
    %v147 = vmul.f32 %v144, 1.442695
    %v148 = vpow.pop %v147
    %v149 = vadd.f32 %v146, 1.0
    %v150 = vadd.f32 %v148, 1.0
    %v151 = vrcp.pop %v149
    %v152 = vmul.f32 1.0, %v151
    %v153 = vrcp.pop %v150
    %v154 = vmul.f32 1.0, %v153
    %v155 = vtanh.pop %v141
    %v156 = vmul.f32 %v152, 0.0
    %158 = vrot.lane.b32.xlu0 %v155, 64
    %v159 = vpop.permute.xlu0 %158
    %v161 = vmul.f32 %v152, %v159
    %163 = vrot.lane.b32.xlu0 %v161, 64
    %v164 = vpop.permute.xlu0 %163
    %v166 = vadd.f32 %v156, %v164
    %v167 = vtanh.pop %v166
    %169 = vrot.lane.b32.xlu0 %v167, 64
    %v170 = vpop.permute.xlu0 %169
    %v172 = vmul.f32 %v154, %v170
    %s173 = scalar_lea.vmem %s0, 2
    %v174 = vld [vmem:[%s173] sm:$0x3]
    %176 = vrot.lane.b32.xlu0 %v174, 64
    %v177 = vpop.permute.xlu0 %176
    %v179 = vsel %vm59, %v172, %v177
    %180 = vmatprep.subr.mxu0 %v52
    %181 = vmatpush1.msra.mxu0 %v51
    %182 = vmatprep.subr.mxu0 %v50
    %183 = vmatpush1.msra.mxu0 %v49
    %184 = vmatprep.subr.mxu0 %v48
    %185 = vmatpush1.msra.mxu0 %v47
    %186 = vmatprep.subr.mxu0 %v46
    %187 = vmatpush1.msra.mxu0 %v45
    %188 = vmatprep.subr.mxu0 %v44
    %189 = vmatpush1.msra.mxu0 %v43
    %190 = vmatprep.subr.mxu0 %v42
    %191 = vmatpush1.msra.mxu0 %v41
    %192 = vmatprep.subr.mxu0 %v40
    %193 = vmatpush1.msra.mxu0 %v39
    %194 = vmatprep.subr.mxu0 %v38
    %195 = vmatpush1.msra.mxu0 %v37
    %196 = vmatprep.subr.mxu0 %v36
    %197 = vmatpush1.msra.mxu0 %v35
    %198 = vmatprep.subr.mxu0 %v34
    %199 = vmatpush1.msra.mxu0 %v33
    %200 = vmatprep.subr.mxu0 %v32
    %201 = vmatpush1.msra.mxu0 %v31
    %202 = vmatprep.subr.mxu0 %v30
    %203 = vmatpush1.msra.mxu0 %v29
    %204 = vmatprep.subr.mxu0 %v28
    %205 = vmatpush1.msra.mxu0 %v27
    %206 = vmatprep.subr.mxu0 %v26
    %207 = vmatpush1.msra.mxu0 %v25
    %208 = vmatprep.subr.mxu0 %v24
    %209 = vmatpush1.msra.mxu0 %v23
    %210 = vmatprep.subr.mxu0 %v22
    %211 = vmatpush1.msra.mxu0 %v21
    %212 = vmatprep.subr.mxu0 0.0
    %213 = vmatpush2.msra.mxu0 0.0
    %214 = vmatprep.subr.mxu0 0.0
    %215 = vmatpush2.msra.mxu0 0.0
    %216 = vmatprep.subr.mxu0 0.0
    %217 = vmatpush2.msra.mxu0 0.0
    %218 = vmatprep.subr.mxu0 0.0
    %219 = vmatpush2.msra.mxu0 0.0
    %220 = vmatprep.subr.mxu0 0.0
    %221 = vmatpush2.msra.mxu0 0.0
    %222 = vmatprep.subr.mxu0 0.0
    %223 = vmatpush2.msra.mxu0 0.0
    %224 = vmatprep.subr.mxu0 0.0
    %225 = vmatpush2.msra.mxu0 0.0
    %226 = vmatprep.subr.mxu0 0.0
    %227 = vmatpush2.msra.mxu0 0.0
    %228 = vmatprep.subr.mxu0 0.0
    %229 = vmatpush2.msra.mxu0 0.0
    %230 = vmatprep.subr.mxu0 0.0
    %231 = vmatpush2.msra.mxu0 0.0
    %232 = vmatprep.subr.mxu0 0.0
    %233 = vmatpush2.msra.mxu0 0.0
    %234 = vmatprep.subr.mxu0 0.0
    %235 = vmatpush2.msra.mxu0 0.0
    %236 = vmatprep.subr.mxu0 0.0
    %237 = vmatpush2.msra.mxu0 0.0
    %238 = vmatprep.subr.mxu0 0.0
    %239 = vmatpush2.msra.mxu0 0.0
    %240 = vmatprep.subr.mxu0 0.0
    %241 = vmatpush2.msra.mxu0 0.0
    %242 = vmatprep.subr.mxu0 0.0
    %243 = vmatpush2.msra.mxu0 0.0
    %244 = vmatprep.mubr.f32.mxu0 0.0
    %245 = vmatmul.mubr.f32.gmra.mxu0 %v179
    %v246 = vpop.f32.mrf.mxu0
    %v247 = vadd.f32 %v68, %v246
    %v248 = vpop.f32.mrf.mxu0
    %v249 = vadd.f32 %v69, %v248
    %250 = vdwg.mxu0
    %v251 = vxor.u32 %v247, 2147483648
    %v252 = vxor.u32 %v249, 2147483648
    %v253 = vmul.f32 %v251, 1.442695
    %v254 = vpow.pop %v253
    %v255 = vmul.f32 %v252, 1.442695
    %v256 = vpow.pop %v255
    %v257 = vadd.f32 %v254, 1.0
    %v258 = vadd.f32 %v256, 1.0
    %v259 = vrcp.pop %v257
    %v260 = vmul.f32 1.0, %v259
    %v261 = vrcp.pop %v258
    %v262 = vmul.f32 1.0, %v261
    %v263 = vtanh.pop %v249
    %v264 = vmul.f32 %v260, %v166
    %266 = vrot.lane.b32.xlu0 %v263, 64
    %v267 = vpop.permute.xlu0 %266
    %v269 = vmul.f32 %v260, %v267
    %271 = vrot.lane.b32.xlu0 %v269, 64
    %v272 = vpop.permute.xlu0 %271
    %v274 = vadd.f32 %v264, %v272
    %v275 = vtanh.pop %v274
    %277 = vrot.lane.b32.xlu0 %v275, 64
    %v278 = vpop.permute.xlu0 %277
    %v280 = vmul.f32 %v262, %v278
    %s281 = scalar_lea.vmem %s0, 4
    %v282 = vld [vmem:[%s281] sm:$0x3]
    %284 = vrot.lane.b32.xlu0 %v282, 64
    %v285 = vpop.permute.xlu0 %284
    %v287 = vsel %vm59, %v280, %v285
    %288 = vmatprep.subr.mxu0 %v52
    %289 = vmatpush1.msra.mxu0 %v51
    %290 = vmatprep.subr.mxu0 %v50
    %291 = vmatpush1.msra.mxu0 %v49
    %292 = vmatprep.subr.mxu0 %v48
    %293 = vmatpush1.msra.mxu0 %v47
    %294 = vmatprep.subr.mxu0 %v46
    %295 = vmatpush1.msra.mxu0 %v45
    %296 = vmatprep.subr.mxu0 %v44
    %297 = vmatpush1.msra.mxu0 %v43
    %298 = vmatprep.subr.mxu0 %v42
    %299 = vmatpush1.msra.mxu0 %v41
    %300 = vmatprep.subr.mxu0 %v40
    %301 = vmatpush1.msra.mxu0 %v39
    %302 = vmatprep.subr.mxu0 %v38
    %303 = vmatpush1.msra.mxu0 %v37
    %304 = vmatprep.subr.mxu0 %v36
    %305 = vmatpush1.msra.mxu0 %v35
    %306 = vmatprep.subr.mxu0 %v34
    %307 = vmatpush1.msra.mxu0 %v33
    %308 = vmatprep.subr.mxu0 %v32
    %309 = vmatpush1.msra.mxu0 %v31
    %310 = vmatprep.subr.mxu0 %v30
    %311 = vmatpush1.msra.mxu0 %v29
    %312 = vmatprep.subr.mxu0 %v28
    %313 = vmatpush1.msra.mxu0 %v27
    %314 = vmatprep.subr.mxu0 %v26
    %315 = vmatpush1.msra.mxu0 %v25
    %316 = vmatprep.subr.mxu0 %v24
    %317 = vmatpush1.msra.mxu0 %v23
    %318 = vmatprep.subr.mxu0 %v22
    %319 = vmatpush1.msra.mxu0 %v21
    %320 = vmatprep.subr.mxu0 0.0
    %321 = vmatpush2.msra.mxu0 0.0
    %322 = vmatprep.subr.mxu0 0.0
    %323 = vmatpush2.msra.mxu0 0.0
    %324 = vmatprep.subr.mxu0 0.0
    %325 = vmatpush2.msra.mxu0 0.0
    %326 = vmatprep.subr.mxu0 0.0
    %327 = vmatpush2.msra.mxu0 0.0
    %328 = vmatprep.subr.mxu0 0.0
    %329 = vmatpush2.msra.mxu0 0.0
    %330 = vmatprep.subr.mxu0 0.0
    %331 = vmatpush2.msra.mxu0 0.0
    %332 = vmatprep.subr.mxu0 0.0
    %333 = vmatpush2.msra.mxu0 0.0
    %334 = vmatprep.subr.mxu0 0.0
    %335 = vmatpush2.msra.mxu0 0.0
    %336 = vmatprep.subr.mxu0 0.0
    %337 = vmatpush2.msra.mxu0 0.0
    %338 = vmatprep.subr.mxu0 0.0
    %339 = vmatpush2.msra.mxu0 0.0
    %340 = vmatprep.subr.mxu0 0.0
    %341 = vmatpush2.msra.mxu0 0.0
    %342 = vmatprep.subr.mxu0 0.0
    %343 = vmatpush2.msra.mxu0 0.0
    %344 = vmatprep.subr.mxu0 0.0
    %345 = vmatpush2.msra.mxu0 0.0
    %346 = vmatprep.subr.mxu0 0.0
    %347 = vmatpush2.msra.mxu0 0.0
    %348 = vmatprep.subr.mxu0 0.0
    %349 = vmatpush2.msra.mxu0 0.0
    %350 = vmatprep.subr.mxu0 0.0
    %351 = vmatpush2.msra.mxu0 0.0
    %352 = vmatprep.mubr.f32.mxu0 0.0
    %353 = vmatmul.mubr.f32.gmra.mxu0 %v287
    %v354 = vpop.f32.mrf.mxu0
    %v355 = vadd.f32 %v68, %v354
    %v356 = vpop.f32.mrf.mxu0
    %v357 = vadd.f32 %v69, %v356
    %358 = vdwg.mxu0
    %v359 = vxor.u32 %v355, 2147483648
    %v360 = vxor.u32 %v357, 2147483648
    %v361 = vmul.f32 %v359, 1.442695
    %v362 = vpow.pop %v361
    %v363 = vmul.f32 %v360, 1.442695
    %v364 = vpow.pop %v363
    %v365 = vadd.f32 %v362, 1.0
    %v366 = vadd.f32 %v364, 1.0
    %v367 = vrcp.pop %v365
    %v368 = vmul.f32 1.0, %v367
    %v369 = vrcp.pop %v366
    %v370 = vmul.f32 1.0, %v369
    %v371 = vtanh.pop %v357
    %v372 = vmul.f32 %v368, %v274
    %374 = vrot.lane.b32.xlu0 %v371, 64
    %v375 = vpop.permute.xlu0 %374
    %v377 = vmul.f32 %v368, %v375
    %379 = vrot.lane.b32.xlu0 %v377, 64
    %v380 = vpop.permute.xlu0 %379
    %v382 = vadd.f32 %v372, %v380
    %v383 = vtanh.pop %v382
    %385 = vrot.lane.b32.xlu0 %v383, 64
    %v386 = vpop.permute.xlu0 %385
    %v388 = vmul.f32 %v370, %v386
    %s389 = scalar_lea.vmem %s0, 6
    %v390 = vld [vmem:[%s389] sm:$0x3]
    %392 = vrot.lane.b32.xlu0 %v390, 64
    %v393 = vpop.permute.xlu0 %392
    %v395 = vsel %vm59, %v388, %v393
    %396 = vmatprep.subr.mxu0 %v52
    %397 = vmatpush1.msra.mxu0 %v51
    %398 = vmatprep.subr.mxu0 %v50
    %399 = vmatpush1.msra.mxu0 %v49
    %400 = vmatprep.subr.mxu0 %v48
    %401 = vmatpush1.msra.mxu0 %v47
    %402 = vmatprep.subr.mxu0 %v46
    %403 = vmatpush1.msra.mxu0 %v45
    %404 = vmatprep.subr.mxu0 %v44
    %405 = vmatpush1.msra.mxu0 %v43
    %406 = vmatprep.subr.mxu0 %v42
    %407 = vmatpush1.msra.mxu0 %v41
    %408 = vmatprep.subr.mxu0 %v40
    %409 = vmatpush1.msra.mxu0 %v39
    %410 = vmatprep.subr.mxu0 %v38
    %411 = vmatpush1.msra.mxu0 %v37
    %412 = vmatprep.subr.mxu0 %v36
    %413 = vmatpush1.msra.mxu0 %v35
    %414 = vmatprep.subr.mxu0 %v34
    %415 = vmatpush1.msra.mxu0 %v33
    %416 = vmatprep.subr.mxu0 %v32
    %417 = vmatpush1.msra.mxu0 %v31
    %418 = vmatprep.subr.mxu0 %v30
    %419 = vmatpush1.msra.mxu0 %v29
    %420 = vmatprep.subr.mxu0 %v28
    %421 = vmatpush1.msra.mxu0 %v27
    %422 = vmatprep.subr.mxu0 %v26
    %423 = vmatpush1.msra.mxu0 %v25
    %424 = vmatprep.subr.mxu0 %v24
    %425 = vmatpush1.msra.mxu0 %v23
    %426 = vmatprep.subr.mxu0 %v22
    %427 = vmatpush1.msra.mxu0 %v21
    %428 = vmatprep.subr.mxu0 0.0
    %429 = vmatpush2.msra.mxu0 0.0
    %430 = vmatprep.subr.mxu0 0.0
    %431 = vmatpush2.msra.mxu0 0.0
    %432 = vmatprep.subr.mxu0 0.0
    %433 = vmatpush2.msra.mxu0 0.0
    %434 = vmatprep.subr.mxu0 0.0
    %435 = vmatpush2.msra.mxu0 0.0
    %436 = vmatprep.subr.mxu0 0.0
    %437 = vmatpush2.msra.mxu0 0.0
    %438 = vmatprep.subr.mxu0 0.0
    %439 = vmatpush2.msra.mxu0 0.0
    %440 = vmatprep.subr.mxu0 0.0
    %441 = vmatpush2.msra.mxu0 0.0
    %442 = vmatprep.subr.mxu0 0.0
    %443 = vmatpush2.msra.mxu0 0.0
    %444 = vmatprep.subr.mxu0 0.0
    %445 = vmatpush2.msra.mxu0 0.0
    %446 = vmatprep.subr.mxu0 0.0
    %447 = vmatpush2.msra.mxu0 0.0
    %448 = vmatprep.subr.mxu0 0.0
    %449 = vmatpush2.msra.mxu0 0.0
    %450 = vmatprep.subr.mxu0 0.0
    %451 = vmatpush2.msra.mxu0 0.0
    %452 = vmatprep.subr.mxu0 0.0
    %453 = vmatpush2.msra.mxu0 0.0
    %454 = vmatprep.subr.mxu0 0.0
    %455 = vmatpush2.msra.mxu0 0.0
    %456 = vmatprep.subr.mxu0 0.0
    %457 = vmatpush2.msra.mxu0 0.0
    %458 = vmatprep.subr.mxu0 0.0
    %459 = vmatpush2.msra.mxu0 0.0
    %460 = vmatprep.mubr.f32.mxu0 0.0
    %461 = vmatmul.mubr.f32.gmra.mxu0 %v395
    %v462 = vpop.f32.mrf.mxu0
    %v463 = vadd.f32 %v68, %v462
    %v464 = vpop.f32.mrf.mxu0
    %v465 = vadd.f32 %v69, %v464
    %466 = vdwg.mxu0
    %v467 = vxor.u32 %v463, 2147483648
    %v468 = vxor.u32 %v465, 2147483648
    %v469 = vmul.f32 %v467, 1.442695
    %v470 = vpow.pop %v469
    %v471 = vmul.f32 %v468, 1.442695
    %v472 = vpow.pop %v471
    %v473 = vadd.f32 %v470, 1.0
    %v474 = vadd.f32 %v472, 1.0
    %v475 = vrcp.pop %v473
    %v476 = vmul.f32 1.0, %v475
    %v477 = vrcp.pop %v474
    %v478 = vmul.f32 1.0, %v477
    %v479 = vtanh.pop %v465
    %v480 = vmul.f32 %v476, %v382
    %482 = vrot.lane.b32.xlu0 %v479, 64
    %v483 = vpop.permute.xlu0 %482
    %v485 = vmul.f32 %v476, %v483
    %487 = vrot.lane.b32.xlu0 %v485, 64
    %v488 = vpop.permute.xlu0 %487
    %v490 = vadd.f32 %v480, %v488
    %v491 = vtanh.pop %v490
    %493 = vrot.lane.b32.xlu0 %v491, 64
    %v494 = vpop.permute.xlu0 %493
    %v496 = vmul.f32 %v478, %v494
    %s497 = scalar_lea.vmem %s0, 8
    %v498 = vld [vmem:[%s497] sm:$0x3]
    %500 = vrot.lane.b32.xlu0 %v498, 64
    %v501 = vpop.permute.xlu0 %500
    %v503 = vsel %vm59, %v496, %v501
    %504 = vmatprep.subr.mxu0 %v52
    %505 = vmatpush1.msra.mxu0 %v51
    %506 = vmatprep.subr.mxu0 %v50
    %507 = vmatpush1.msra.mxu0 %v49
    %508 = vmatprep.subr.mxu0 %v48
    %509 = vmatpush1.msra.mxu0 %v47
    %510 = vmatprep.subr.mxu0 %v46
    %511 = vmatpush1.msra.mxu0 %v45
    %512 = vmatprep.subr.mxu0 %v44
    %513 = vmatpush1.msra.mxu0 %v43
    %514 = vmatprep.subr.mxu0 %v42
    %515 = vmatpush1.msra.mxu0 %v41
    %516 = vmatprep.subr.mxu0 %v40
    %517 = vmatpush1.msra.mxu0 %v39
    %518 = vmatprep.subr.mxu0 %v38
    %519 = vmatpush1.msra.mxu0 %v37
    %520 = vmatprep.subr.mxu0 %v36
    %521 = vmatpush1.msra.mxu0 %v35
    %522 = vmatprep.subr.mxu0 %v34
    %523 = vmatpush1.msra.mxu0 %v33
    %524 = vmatprep.subr.mxu0 %v32
    %525 = vmatpush1.msra.mxu0 %v31
    %526 = vmatprep.subr.mxu0 %v30
    %527 = vmatpush1.msra.mxu0 %v29
    %528 = vmatprep.subr.mxu0 %v28
    %529 = vmatpush1.msra.mxu0 %v27
    %530 = vmatprep.subr.mxu0 %v26
    %531 = vmatpush1.msra.mxu0 %v25
    %532 = vmatprep.subr.mxu0 %v24
    %533 = vmatpush1.msra.mxu0 %v23
    %534 = vmatprep.subr.mxu0 %v22
    %535 = vmatpush1.msra.mxu0 %v21
    %536 = vmatprep.subr.mxu0 0.0
    %537 = vmatpush2.msra.mxu0 0.0
    %538 = vmatprep.subr.mxu0 0.0
    %539 = vmatpush2.msra.mxu0 0.0
    %540 = vmatprep.subr.mxu0 0.0
    %541 = vmatpush2.msra.mxu0 0.0
    %542 = vmatprep.subr.mxu0 0.0
    %543 = vmatpush2.msra.mxu0 0.0
    %544 = vmatprep.subr.mxu0 0.0
    %545 = vmatpush2.msra.mxu0 0.0
    %546 = vmatprep.subr.mxu0 0.0
    %547 = vmatpush2.msra.mxu0 0.0
    %548 = vmatprep.subr.mxu0 0.0
    %549 = vmatpush2.msra.mxu0 0.0
    %550 = vmatprep.subr.mxu0 0.0
    %551 = vmatpush2.msra.mxu0 0.0
    %552 = vmatprep.subr.mxu0 0.0
    %553 = vmatpush2.msra.mxu0 0.0
    %554 = vmatprep.subr.mxu0 0.0
    %555 = vmatpush2.msra.mxu0 0.0
    %556 = vmatprep.subr.mxu0 0.0
    %557 = vmatpush2.msra.mxu0 0.0
    %558 = vmatprep.subr.mxu0 0.0
    %559 = vmatpush2.msra.mxu0 0.0
    %560 = vmatprep.subr.mxu0 0.0
    %561 = vmatpush2.msra.mxu0 0.0
    %562 = vmatprep.subr.mxu0 0.0
    %563 = vmatpush2.msra.mxu0 0.0
    %564 = vmatprep.subr.mxu0 0.0
    %565 = vmatpush2.msra.mxu0 0.0
    %566 = vmatprep.subr.mxu0 0.0
    %567 = vmatpush2.msra.mxu0 0.0
    %568 = vmatprep.mubr.f32.mxu0 0.0
    %569 = vmatmul.mubr.f32.gmra.mxu0 %v503
    %v570 = vpop.f32.mrf.mxu0
    %v571 = vadd.f32 %v68, %v570
    %v572 = vpop.f32.mrf.mxu0
    %v573 = vadd.f32 %v69, %v572
    %574 = vdwg.mxu0
    %v575 = vxor.u32 %v571, 2147483648
    %v576 = vxor.u32 %v573, 2147483648
    %v577 = vmul.f32 %v575, 1.442695
    %v578 = vpow.pop %v577
    %v579 = vmul.f32 %v576, 1.442695
    %v580 = vpow.pop %v579
    %v581 = vadd.f32 %v578, 1.0
    %v582 = vadd.f32 %v580, 1.0
    %v583 = vrcp.pop %v581
    %v584 = vmul.f32 1.0, %v583
    %v585 = vrcp.pop %v582
    %v586 = vmul.f32 1.0, %v585
    %v587 = vtanh.pop %v573
    %v588 = vmul.f32 %v584, %v490
    %590 = vrot.lane.b32.xlu0 %v587, 64
    %v591 = vpop.permute.xlu0 %590
    %v593 = vmul.f32 %v584, %v591
    %595 = vrot.lane.b32.xlu0 %v593, 64
    %v596 = vpop.permute.xlu0 %595
    %v598 = vadd.f32 %v588, %v596
    %v599 = vtanh.pop %v598
    %601 = vrot.lane.b32.xlu0 %v599, 64
    %v602 = vpop.permute.xlu0 %601
    %v604 = vmul.f32 %v586, %v602
    %s605 = scalar_lea.vmem %s0, 10
    %v606 = vld [vmem:[%s605] sm:$0x3]
    %608 = vrot.lane.b32.xlu0 %v606, 64
    %v609 = vpop.permute.xlu0 %608
    %v611 = vsel %vm59, %v604, %v609
    %612 = vmatprep.subr.mxu0 %v52
    %613 = vmatpush1.msra.mxu0 %v51
    %614 = vmatprep.subr.mxu0 %v50
    %615 = vmatpush1.msra.mxu0 %v49
    %616 = vmatprep.subr.mxu0 %v48
    %617 = vmatpush1.msra.mxu0 %v47
    %618 = vmatprep.subr.mxu0 %v46
    %619 = vmatpush1.msra.mxu0 %v45
    %620 = vmatprep.subr.mxu0 %v44
    %621 = vmatpush1.msra.mxu0 %v43
    %622 = vmatprep.subr.mxu0 %v42
    %623 = vmatpush1.msra.mxu0 %v41
    %624 = vmatprep.subr.mxu0 %v40
    %625 = vmatpush1.msra.mxu0 %v39
    %626 = vmatprep.subr.mxu0 %v38
    %627 = vmatpush1.msra.mxu0 %v37
    %628 = vmatprep.subr.mxu0 %v36
    %629 = vmatpush1.msra.mxu0 %v35
    %630 = vmatprep.subr.mxu0 %v34
    %631 = vmatpush1.msra.mxu0 %v33
    %632 = vmatprep.subr.mxu0 %v32
    %633 = vmatpush1.msra.mxu0 %v31
    %634 = vmatprep.subr.mxu0 %v30
    %635 = vmatpush1.msra.mxu0 %v29
    %636 = vmatprep.subr.mxu0 %v28
    %637 = vmatpush1.msra.mxu0 %v27
    %638 = vmatprep.subr.mxu0 %v26
    %639 = vmatpush1.msra.mxu0 %v25
    %640 = vmatprep.subr.mxu0 %v24
    %641 = vmatpush1.msra.mxu0 %v23
    %642 = vmatprep.subr.mxu0 %v22
    %643 = vmatpush1.msra.mxu0 %v21
    %644 = vmatprep.subr.mxu0 0.0
    %645 = vmatpush2.msra.mxu0 0.0
    %646 = vmatprep.subr.mxu0 0.0
    %647 = vmatpush2.msra.mxu0 0.0
    %648 = vmatprep.subr.mxu0 0.0
    %649 = vmatpush2.msra.mxu0 0.0
    %650 = vmatprep.subr.mxu0 0.0
    %651 = vmatpush2.msra.mxu0 0.0
    %652 = vmatprep.subr.mxu0 0.0
    %653 = vmatpush2.msra.mxu0 0.0
    %654 = vmatprep.subr.mxu0 0.0
    %655 = vmatpush2.msra.mxu0 0.0
    %656 = vmatprep.subr.mxu0 0.0
    %657 = vmatpush2.msra.mxu0 0.0
    %658 = vmatprep.subr.mxu0 0.0
    %659 = vmatpush2.msra.mxu0 0.0
    %660 = vmatprep.subr.mxu0 0.0
    %661 = vmatpush2.msra.mxu0 0.0
    %662 = vmatprep.subr.mxu0 0.0
    %663 = vmatpush2.msra.mxu0 0.0
    %664 = vmatprep.subr.mxu0 0.0
    %665 = vmatpush2.msra.mxu0 0.0
    %666 = vmatprep.subr.mxu0 0.0
    %667 = vmatpush2.msra.mxu0 0.0
    %668 = vmatprep.subr.mxu0 0.0
    %669 = vmatpush2.msra.mxu0 0.0
    %670 = vmatprep.subr.mxu0 0.0
    %671 = vmatpush2.msra.mxu0 0.0
    %672 = vmatprep.subr.mxu0 0.0
    %673 = vmatpush2.msra.mxu0 0.0
    %674 = vmatprep.subr.mxu0 0.0
    %675 = vmatpush2.msra.mxu0 0.0
    %676 = vmatprep.mubr.f32.mxu0 0.0
    %677 = vmatmul.mubr.f32.gmra.mxu0 %v611
    %v678 = vpop.f32.mrf.mxu0
    %v679 = vadd.f32 %v68, %v678
    %v680 = vpop.f32.mrf.mxu0
    %v681 = vadd.f32 %v69, %v680
    %682 = vdwg.mxu0
    %v683 = vxor.u32 %v679, 2147483648
    %v684 = vxor.u32 %v681, 2147483648
    %v685 = vmul.f32 %v683, 1.442695
    %v686 = vpow.pop %v685
    %v687 = vmul.f32 %v684, 1.442695
    %v688 = vpow.pop %v687
    %v689 = vadd.f32 %v686, 1.0
    %v690 = vadd.f32 %v688, 1.0
    %v691 = vrcp.pop %v689
    %v692 = vmul.f32 1.0, %v691
    %v693 = vrcp.pop %v690
    %v694 = vmul.f32 1.0, %v693
    %v695 = vtanh.pop %v681
    %v696 = vmul.f32 %v692, %v598
    %698 = vrot.lane.b32.xlu0 %v695, 64
    %v699 = vpop.permute.xlu0 %698
    %v701 = vmul.f32 %v692, %v699
    %703 = vrot.lane.b32.xlu0 %v701, 64
    %v704 = vpop.permute.xlu0 %703
    %v706 = vadd.f32 %v696, %v704
    %v707 = vtanh.pop %v706
    %709 = vrot.lane.b32.xlu0 %v707, 64
    %v710 = vpop.permute.xlu0 %709
    %v712 = vmul.f32 %v694, %v710
    %s713 = scalar_lea.vmem %s0, 12
    %v714 = vld [vmem:[%s713] sm:$0x3]
    %716 = vrot.lane.b32.xlu0 %v714, 64
    %v717 = vpop.permute.xlu0 %716
    %v719 = vsel %vm59, %v712, %v717
    %720 = vmatprep.subr.mxu0 %v52
    %721 = vmatpush1.msra.mxu0 %v51
    %722 = vmatprep.subr.mxu0 %v50
    %723 = vmatpush1.msra.mxu0 %v49
    %724 = vmatprep.subr.mxu0 %v48
    %725 = vmatpush1.msra.mxu0 %v47
    %726 = vmatprep.subr.mxu0 %v46
    %727 = vmatpush1.msra.mxu0 %v45
    %728 = vmatprep.subr.mxu0 %v44
    %729 = vmatpush1.msra.mxu0 %v43
    %730 = vmatprep.subr.mxu0 %v42
    %731 = vmatpush1.msra.mxu0 %v41
    %732 = vmatprep.subr.mxu0 %v40
    %733 = vmatpush1.msra.mxu0 %v39
    %734 = vmatprep.subr.mxu0 %v38
    %735 = vmatpush1.msra.mxu0 %v37
    %736 = vmatprep.subr.mxu0 %v36
    %737 = vmatpush1.msra.mxu0 %v35
    %738 = vmatprep.subr.mxu0 %v34
    %739 = vmatpush1.msra.mxu0 %v33
    %740 = vmatprep.subr.mxu0 %v32
    %741 = vmatpush1.msra.mxu0 %v31
    %742 = vmatprep.subr.mxu0 %v30
    %743 = vmatpush1.msra.mxu0 %v29
    %744 = vmatprep.subr.mxu0 %v28
    %745 = vmatpush1.msra.mxu0 %v27
    %746 = vmatprep.subr.mxu0 %v26
    %747 = vmatpush1.msra.mxu0 %v25
    %748 = vmatprep.subr.mxu0 %v24
    %749 = vmatpush1.msra.mxu0 %v23
    %750 = vmatprep.subr.mxu0 %v22
    %751 = vmatpush1.msra.mxu0 %v21
    %752 = vmatprep.subr.mxu0 0.0
    %753 = vmatpush2.msra.mxu0 0.0
    %754 = vmatprep.subr.mxu0 0.0
    %755 = vmatpush2.msra.mxu0 0.0
    %756 = vmatprep.subr.mxu0 0.0
    %757 = vmatpush2.msra.mxu0 0.0
    %758 = vmatprep.subr.mxu0 0.0
    %759 = vmatpush2.msra.mxu0 0.0
    %760 = vmatprep.subr.mxu0 0.0
    %761 = vmatpush2.msra.mxu0 0.0
    %762 = vmatprep.subr.mxu0 0.0
    %763 = vmatpush2.msra.mxu0 0.0
    %764 = vmatprep.subr.mxu0 0.0
    %765 = vmatpush2.msra.mxu0 0.0
    %766 = vmatprep.subr.mxu0 0.0
    %767 = vmatpush2.msra.mxu0 0.0
    %768 = vmatprep.subr.mxu0 0.0
    %769 = vmatpush2.msra.mxu0 0.0
    %770 = vmatprep.subr.mxu0 0.0
    %771 = vmatpush2.msra.mxu0 0.0
    %772 = vmatprep.subr.mxu0 0.0
    %773 = vmatpush2.msra.mxu0 0.0
    %774 = vmatprep.subr.mxu0 0.0
    %775 = vmatpush2.msra.mxu0 0.0
    %776 = vmatprep.subr.mxu0 0.0
    %777 = vmatpush2.msra.mxu0 0.0
    %778 = vmatprep.subr.mxu0 0.0
    %779 = vmatpush2.msra.mxu0 0.0
    %780 = vmatprep.subr.mxu0 0.0
    %781 = vmatpush2.msra.mxu0 0.0
    %782 = vmatprep.subr.mxu0 0.0
    %783 = vmatpush2.msra.mxu0 0.0
    %784 = vmatprep.mubr.f32.mxu0 0.0
    %785 = vmatmul.mubr.f32.gmra.mxu0 %v719
    %v786 = vpop.f32.mrf.mxu0
    %v787 = vadd.f32 %v68, %v786
    %v788 = vpop.f32.mrf.mxu0
    %v789 = vadd.f32 %v69, %v788
    %790 = vdwg.mxu0
    %v791 = vxor.u32 %v787, 2147483648
    %v792 = vxor.u32 %v789, 2147483648
    %v793 = vmul.f32 %v791, 1.442695
    %v794 = vpow.pop %v793
    %v795 = vmul.f32 %v792, 1.442695
    %v796 = vpow.pop %v795
    %v797 = vadd.f32 %v794, 1.0
    %v798 = vadd.f32 %v796, 1.0
    %v799 = vrcp.pop %v797
    %v800 = vmul.f32 1.0, %v799
    %v801 = vrcp.pop %v798
    %v802 = vmul.f32 1.0, %v801
    %v803 = vtanh.pop %v789
    %v804 = vmul.f32 %v800, %v706
    %806 = vrot.lane.b32.xlu0 %v803, 64
    %v807 = vpop.permute.xlu0 %806
    %v809 = vmul.f32 %v800, %v807
    %811 = vrot.lane.b32.xlu0 %v809, 64
    %v812 = vpop.permute.xlu0 %811
    %v814 = vadd.f32 %v804, %v812
    %v815 = vtanh.pop %v814
    %817 = vrot.lane.b32.xlu0 %v815, 64
    %v818 = vpop.permute.xlu0 %817
    %v820 = vmul.f32 %v802, %v818
    %s821 = scalar_lea.vmem %s0, 14
    %v822 = vld [vmem:[%s821] sm:$0x3]
    %824 = vrot.lane.b32.xlu0 %v822, 64
    %v825 = vpop.permute.xlu0 %824
    %v827 = vsel %vm59, %v820, %v825
    %828 = vmatprep.subr.mxu0 %v52
    %829 = vmatpush1.msra.mxu0 %v51
    %830 = vmatprep.subr.mxu0 %v50
    %831 = vmatpush1.msra.mxu0 %v49
    %832 = vmatprep.subr.mxu0 %v48
    %833 = vmatpush1.msra.mxu0 %v47
    %834 = vmatprep.subr.mxu0 %v46
    %835 = vmatpush1.msra.mxu0 %v45
    %836 = vmatprep.subr.mxu0 %v44
    %837 = vmatpush1.msra.mxu0 %v43
    %838 = vmatprep.subr.mxu0 %v42
    %839 = vmatpush1.msra.mxu0 %v41
    %840 = vmatprep.subr.mxu0 %v40
    %841 = vmatpush1.msra.mxu0 %v39
    %842 = vmatprep.subr.mxu0 %v38
    %843 = vmatpush1.msra.mxu0 %v37
    %844 = vmatprep.subr.mxu0 %v36
    %845 = vmatpush1.msra.mxu0 %v35
    %846 = vmatprep.subr.mxu0 %v34
    %847 = vmatpush1.msra.mxu0 %v33
    %848 = vmatprep.subr.mxu0 %v32
    %849 = vmatpush1.msra.mxu0 %v31
    %850 = vmatprep.subr.mxu0 %v30
    %851 = vmatpush1.msra.mxu0 %v29
    %852 = vmatprep.subr.mxu0 %v28
    %853 = vmatpush1.msra.mxu0 %v27
    %854 = vmatprep.subr.mxu0 %v26
    %855 = vmatpush1.msra.mxu0 %v25
    %856 = vmatprep.subr.mxu0 %v24
    %857 = vmatpush1.msra.mxu0 %v23
    %858 = vmatprep.subr.mxu0 %v22
    %859 = vmatpush1.msra.mxu0 %v21
    %860 = vmatprep.subr.mxu0 0.0
    %861 = vmatpush2.msra.mxu0 0.0
    %862 = vmatprep.subr.mxu0 0.0
    %863 = vmatpush2.msra.mxu0 0.0
    %864 = vmatprep.subr.mxu0 0.0
    %865 = vmatpush2.msra.mxu0 0.0
    %866 = vmatprep.subr.mxu0 0.0
    %867 = vmatpush2.msra.mxu0 0.0
    %868 = vmatprep.subr.mxu0 0.0
    %869 = vmatpush2.msra.mxu0 0.0
    %870 = vmatprep.subr.mxu0 0.0
    %871 = vmatpush2.msra.mxu0 0.0
    %872 = vmatprep.subr.mxu0 0.0
    %873 = vmatpush2.msra.mxu0 0.0
    %874 = vmatprep.subr.mxu0 0.0
    %875 = vmatpush2.msra.mxu0 0.0
    %876 = vmatprep.subr.mxu0 0.0
    %877 = vmatpush2.msra.mxu0 0.0
    %878 = vmatprep.subr.mxu0 0.0
    %879 = vmatpush2.msra.mxu0 0.0
    %880 = vmatprep.subr.mxu0 0.0
    %881 = vmatpush2.msra.mxu0 0.0
    %882 = vmatprep.subr.mxu0 0.0
    %883 = vmatpush2.msra.mxu0 0.0
    %884 = vmatprep.subr.mxu0 0.0
    %885 = vmatpush2.msra.mxu0 0.0
    %886 = vmatprep.subr.mxu0 0.0
    %887 = vmatpush2.msra.mxu0 0.0
    %888 = vmatprep.subr.mxu0 0.0
    %889 = vmatpush2.msra.mxu0 0.0
    %890 = vmatprep.subr.mxu0 0.0
    %891 = vmatpush2.msra.mxu0 0.0
    %892 = vmatprep.mubr.f32.mxu0 0.0
    %893 = vmatmul.mubr.f32.gmra.mxu0 %v827
    %v894 = vpop.f32.mrf.mxu0
    %v895 = vadd.f32 %v68, %v894
    %v896 = vpop.f32.mrf.mxu0
    %v897 = vadd.f32 %v69, %v896
    %898 = vdwg.mxu0
    %v899 = vxor.u32 %v895, 2147483648
    %v900 = vxor.u32 %v897, 2147483648
    %v901 = vmul.f32 %v899, 1.442695
    %v902 = vpow.pop %v901
    %v903 = vmul.f32 %v900, 1.442695
    %v904 = vpow.pop %v903
    %v905 = vadd.f32 %v902, 1.0
    %v906 = vadd.f32 %v904, 1.0
    %v907 = vrcp.pop %v905
    %v908 = vmul.f32 1.0, %v907
    %v909 = vrcp.pop %v906
    %v910 = vmul.f32 1.0, %v909
    %v911 = vtanh.pop %v897
    %v912 = vmul.f32 %v908, %v814
    %914 = vrot.lane.b32.xlu0 %v911, 64
    %v915 = vpop.permute.xlu0 %914
    %v917 = vmul.f32 %v908, %v915
    %919 = vrot.lane.b32.xlu0 %v917, 64
    %v920 = vpop.permute.xlu0 %919
    %v922 = vadd.f32 %v912, %v920
    %v923 = vtanh.pop %v922
    %925 = vrot.lane.b32.xlu0 %v923, 64
    %v926 = vpop.permute.xlu0 %925
    %v928 = vmul.f32 %v910, %v926
    %v929 = vld [vmem:[%s3] sm:$0xff]
    %v930 = vld [vmem:[%s3 + $0x8] sm:$0xff]
    %v931 = vld [vmem:[%s3 + $0x10] sm:$0xff]
    %v932 = vld [vmem:[%s3 + $0x18] sm:$0xff]
    %v933 = vld [vmem:[%s3 + $0x20] sm:$0xff]
    %v934 = vld [vmem:[%s3 + $0x28] sm:$0xff]
    %v935 = vld [vmem:[%s3 + $0x30] sm:$0xff]
    %v936 = vld [vmem:[%s3 + $0x38] sm:$0xff]
    %v937 = vld [vmem:[%s4] sm:$0x3]
    %v939 = vsel %vm59, %v928, 0
    %941 = vmatprep.subr.mxu0 0.0
    %942 = vmatpush1.msra.mxu0 0.0
    %943 = vmatprep.subr.mxu0 0.0
    %944 = vmatpush1.msra.mxu0 0.0
    %945 = vmatprep.subr.mxu0 0.0
    %946 = vmatpush1.msra.mxu0 0.0
    %947 = vmatprep.subr.mxu0 0.0
    %948 = vmatpush1.msra.mxu0 0.0
    %949 = vmatprep.subr.mxu0 0.0
    %950 = vmatpush1.msra.mxu0 0.0
    %951 = vmatprep.subr.mxu0 0.0
    %952 = vmatpush1.msra.mxu0 0.0
    %953 = vmatprep.subr.mxu0 0.0
    %954 = vmatpush1.msra.mxu0 0.0
    %955 = vmatprep.subr.mxu0 0.0
    %956 = vmatpush1.msra.mxu0 0.0
    %957 = vmatprep.subr.mxu0 0.0
    %958 = vmatpush1.msra.mxu0 %v936
    %959 = vmatprep.subr.mxu0 0.0
    %960 = vmatpush1.msra.mxu0 %v935
    %961 = vmatprep.subr.mxu0 0.0
    %962 = vmatpush1.msra.mxu0 %v934
    %963 = vmatprep.subr.mxu0 0.0
    %964 = vmatpush1.msra.mxu0 %v933
    %965 = vmatprep.subr.mxu0 0.0
    %966 = vmatpush1.msra.mxu0 %v932
    %967 = vmatprep.subr.mxu0 0.0
    %968 = vmatpush1.msra.mxu0 %v931
    %969 = vmatprep.subr.mxu0 0.0
    %970 = vmatpush1.msra.mxu0 %v930
    %971 = vmatprep.subr.mxu0 0.0
    %972 = vmatpush1.msra.mxu0 %v929
    %973 = vmatprep.subr.mxu0 0.0
    %974 = vmatpush2.msra.mxu0 0.0
    %975 = vmatprep.subr.mxu0 0.0
    %976 = vmatpush2.msra.mxu0 0.0
    %977 = vmatprep.subr.mxu0 0.0
    %978 = vmatpush2.msra.mxu0 0.0
    %979 = vmatprep.subr.mxu0 0.0
    %980 = vmatpush2.msra.mxu0 0.0
    %981 = vmatprep.subr.mxu0 0.0
    %982 = vmatpush2.msra.mxu0 0.0
    %983 = vmatprep.subr.mxu0 0.0
    %984 = vmatpush2.msra.mxu0 0.0
    %985 = vmatprep.subr.mxu0 0.0
    %986 = vmatpush2.msra.mxu0 0.0
    %987 = vmatprep.subr.mxu0 0.0
    %988 = vmatpush2.msra.mxu0 0.0
    %989 = vmatprep.subr.mxu0 0.0
    %990 = vmatpush2.msra.mxu0 0.0
    %991 = vmatprep.subr.mxu0 0.0
    %992 = vmatpush2.msra.mxu0 0.0
    %993 = vmatprep.subr.mxu0 0.0
    %994 = vmatpush2.msra.mxu0 0.0
    %995 = vmatprep.subr.mxu0 0.0
    %996 = vmatpush2.msra.mxu0 0.0
    %997 = vmatprep.subr.mxu0 0.0
    %998 = vmatpush2.msra.mxu0 0.0
    %999 = vmatprep.subr.mxu0 0.0
    %1000 = vmatpush2.msra.mxu0 0.0
    %1001 = vmatprep.subr.mxu0 0.0
    %1002 = vmatpush2.msra.mxu0 0.0
    %1003 = vmatprep.subr.mxu0 0.0
    %1004 = vmatpush2.msra.mxu0 0.0
    %1005 = vmatprep.mubr.f32.mxu0 0.0
    %1006 = vmatmul.mubr.f32.gmra.mxu0 %v939
    %v1007 = vpop.f32.mrf.mxu0
    %v1008 = vadd.f32 %v937, %v1007
    %v1009 = vpop.f32.mrf.mxu0
    %1010 = vdwg.mxu0
    %1011 = vst [vmem:[#allocation2] sm:$0x3] %v1008
    // Predicated region
    $region22: #{rnn_forward.1} parent=1 // pred_check
      _
    $region23: #{rnn_forward.1} parent=1 // pred_check_branch
      %1013 = sbr.rel (0) target = $region25
    $region24: #{rnn_forward.1} parent=1 // pred_region
      %s1015 = ssub.s32 32, 32
      %1016 = vsyncadd [#allocation3], %s1015
      %s1018 = sshll.u32 [#allocation2], 4
      %s1019 = int_to_ptr.vmem [resolvable:$true] %s1018
      %1021 = dma.vmem_to_hbm [thread:$0]  %s1019, 32, %s5, [#allocation3]
    $region25: #{rnn_forward.1} parent=1 // pred_fallthru
      _
    // Predicated region
    $region26: #{rnn_forward.1} parent=1 // pred_check
      _
    $region27: #{rnn_forward.1} parent=1 // pred_check_branch
      %1023 = sbr.rel (0) target = $region29
    $region28: #{rnn_forward.1} parent=1 // pred_region
      %1024 = dma.done [#allocation3], 32
    $region29: #{rnn_forward.1} parent=1 // pred_fallthru
      _
    %1025 = vsyncpa [#allocation3], 1

</llo_original>
